<compile_context>
chip_gen: v5e
topology: v5e:2x2
jax: 0.10.0
libtpu: 0.0.40
codegen_flags: <defaults>
</compile_context>

<pallas_src>
import functools

import jax
import jax.numpy as jnp
from jax import lax
from jax.experimental import pallas as pl
from jax.experimental.pallas import tpu as pltpu

_LANE = 128


def _round_up(x, m):
    return ((x + m - 1) // m) * m


def _sublane_multiple(dtype):
    # f32 -> 8 sublanes, bf16 -> 16, int8/fp8 -> 32 (sub-32-bit packs in sublanes).
    itemsize = jnp.dtype(dtype).itemsize
    return max(8, 32 // max(itemsize, 1))


def _vmem_capacity_bytes():
    """Generation-aware VMEM capacity (128 MiB v5e/v6e, 64 MiB v7x)."""
    try:
        info = pltpu.get_tpu_info()
        cap = int(getattr(info, "vmem_capacity_bytes", 0) or 0)
        if cap > 0:
            return cap
    except Exception:
        pass
    return 64 * 1024 * 1024  # safe fallback = smallest supported generation (v7x)


def _vmem_plan(B, D, C, x_dtype, w_dtype, out_dtype, tile_b=None):
    """Pick the batch tile (multiple of 128 lanes) and an explicit VMEM limit.

    All estimates are TPU-tile-padding aware: last dims round up to 128 lanes,
    second-to-last dims round up to the dtype's sublane multiple.
    """
    cap = _vmem_capacity_bytes()
    budget = int(0.40 * cap)  # ~51 MiB on 128 MiB parts, ~25 MiB on v7x

    x_item = jnp.dtype(x_dtype).itemsize
    w_item = jnp.dtype(w_dtype).itemsize
    o_item = jnp.dtype(out_dtype).itemsize

    d_pad = _round_up(D, _LANE)
    c_w = _round_up(C, _sublane_multiple(w_dtype))
    c_o = _round_up(C, _sublane_multiple(out_dtype))
    c_f32 = _round_up(C, 8)

    # weight + bias (double-buffered by the default pipeline, but tiny).
    fixed = 2 * c_w * d_pad * w_item + 2 * c_f32 * _LANE * 4

    # Per batch row: double-buffered lane-padded x tile, double-buffered
    # transposed (C, TILE_B) output tile, plus ~6 f32 epilogue temporaries.
    per_row = 2 * d_pad * x_item + 2 * c_o * o_item + 6 * c_f32 * 4

    if tile_b is None:
        rows = max(_LANE, (budget - fixed) // max(per_row, 1))
        tile_b = (rows // _LANE) * _LANE
        # Keep >=2 grid steps when B allows it so the "parallel" batch axis can
        # be sharded over v7x's two TensorCores (neutral on v5e/v6e, 1 TC).
        tile_b = min(tile_b, _round_up(pl.cdiv(B, 2), _LANE))
        tile_b = max(_LANE, tile_b)
    else:
        tile_b = max(_LANE, _round_up(int(tile_b), _LANE))

    est = fixed + per_row * tile_b
    vmem_limit = int(min(int(0.90 * cap), max(est + (16 << 20), 32 << 20)))
    return int(tile_b), vmem_limit


def _sentiment_kernel(x_ref, w_ref, b_ref, out_ref):
    """One batch tile: x (TILE_B, D), w (C, D), b (C, 1) -> out (C, TILE_B)."""
    x = x_ref[...]  # native dtype straight to the MXU (full-rate bf16 path)
    w = w_ref[...]

    # Transposed linear layer: contract over D -> (C, TILE_B), f32 accumulation.
    logits = lax.dot_general(
        w, x,
        dimension_numbers=(((1,), (1,)), ((), ())),
        preferred_element_type=jnp.float32,
    ) + b_ref[...].astype(jnp.float32)

    # Numerically stable log_softmax along the class (sublane) axis.  With this
    # transposed layout every vreg is lane-dense (TILE_B % 128 == 0), so the
    # max/exp/sum/log epilogue and the store touch ~16-32x fewer vregs than a
    # (TILE_B, C) layout with C ~ 4, and the stores are unmasked full-lane vst's.
    m = jnp.max(logits, axis=0, keepdims=True)
    shifted = logits - m
    lse = jnp.log(jnp.sum(jnp.exp(shifted), axis=0, keepdims=True))
    out_ref[...] = (shifted - lse).astype(out_ref.dtype)


@functools.partial(jax.jit, static_argnames=("tile_b", "vmem_limit", "out_dtype"))
def _sentiment_forward(x, w, b_col, *, tile_b, vmem_limit, out_dtype):
    B, D = x.shape
    C = w.shape[0]
    grid = (pl.cdiv(B, tile_b),)

    out_t = pl.pallas_call(
        _sentiment_kernel,
        out_shape=jax.ShapeDtypeStruct((C, B), out_dtype),
        grid_spec=pltpu.PrefetchScalarGridSpec(
            num_scalar_prefetch=0,
            grid=grid,
            in_specs=[
                pl.BlockSpec((tile_b, D), lambda i: (i, 0)),  # x: streamed per tile
                pl.BlockSpec((C, D), lambda i: (0, 0)),       # weight: VMEM-resident
                pl.BlockSpec((C, 1), lambda i: (0, 0)),       # bias:   VMEM-resident
            ],
            out_specs=pl.BlockSpec((C, tile_b), lambda i: (0, i)),  # lane-dense
        ),
        compiler_params=pltpu.CompilerParams(
            dimension_semantics=("parallel",),  # megacore batch split on v7x
            vmem_limit_bytes=vmem_limit,
        ),
    )(x, w, b_col)

    # (C, B) -> (B, C); B*C elements, negligible next to the x read traffic.
    return out_t.T


def sentiment_predictor(inputs, weight, bias, *, tile_b=None, out_dtype=None):
    """Forward pass matching SentimentPredictor.forward.

    inputs: (B, input_dim)                 f32 or bf16
    weight: (num_classes, input_dim)       nn.Linear layout (NOT transposed)
    bias:   (num_classes,)
    returns: (B, num_classes) log-probabilities (dtype defaults to inputs.dtype;
             accumulation and the softmax math are done in f32).
    """
    B, D = inputs.shape
    C, D2 = weight.shape
    assert D == D2, (D, D2)
    assert bias.shape == (C,), bias.shape

    if weight.dtype != inputs.dtype:  # keep a single MXU input dtype
        weight = weight.astype(inputs.dtype)
    if out_dtype is None:
        out_dtype = inputs.dtype
    out_dtype = jnp.dtype(out_dtype)

    tile_b, vmem_limit = _vmem_plan(B, D, C, inputs.dtype, weight.dtype,
                                    out_dtype, tile_b=tile_b)
    b_col = bias.reshape(C, 1)  # (C, 1): broadcasts along lanes in-kernel
    return _sentiment_forward(inputs, weight, b_col, tile_b=tile_b,
                              vmem_limit=vmem_limit, out_dtype=out_dtype)


# TODO(synk): get_loss (cross-entropy against target_probs) is a training-time
# method, not part of the forward pass, so it is intentionally not implemented.


def _reference(inputs, weight, bias):
    logits = jnp.dot(inputs.astype(jnp.float32), weight.astype(jnp.float32).T,
                     precision=lax.Precision.HIGHEST) + bias.astype(jnp.float32)
    return jax.nn.log_softmax(logits, axis=1)


if __name__ == "__main__":
    key = jax.random.PRNGKey(0)
    k_x, k_w, k_b = jax.random.split(key, 3)

    batch, input_dim, num_classes = 8, 32, 4

    x = jax.random.normal(k_x, (batch, input_dim), dtype=jnp.float32)
    # "nn.Linear"-shaped params: (num_classes, input_dim), (num_classes,)
    w = jax.random.normal(k_w, (num_classes, input_dim), dtype=jnp.float32) * 0.1
    b = jax.random.normal(k_b, (num_classes,), dtype=jnp.float32) * 0.1

    out = sentiment_predictor(x, w, b)
    jax.block_until_ready(out)
    ref = _reference(x, w, b)
    assert out.shape == (batch, num_classes)
    assert jnp.allclose(out, ref, atol=2e-3, rtol=2e-3), (
        f"max abs err {jnp.max(jnp.abs(out - ref))}")

    # Multi-tile grid: two batch tiles, the second one a masked boundary tile.
    big_b = 1064
    xb = jax.random.normal(k_x, (big_b, input_dim), dtype=jnp.float32)
    out_big = sentiment_predictor(xb, w, b)
    jax.block_until_ready(out_big)
    ref_big = _reference(xb, w, b)
    assert out_big.shape == (big_b, num_classes)
    assert jnp.allclose(out_big, ref_big, atol=2e-3, rtol=2e-3), (
        f"max abs err {jnp.max(jnp.abs(out_big - ref_big))}")

    # bf16 path: bf16 MXU feed, f32 math, bf16 log-prob writeback.
    x_bf16 = xb.astype(jnp.bfloat16)
    w_bf16 = w.astype(jnp.bfloat16)
    out_bf16 = sentiment_predictor(x_bf16, w_bf16, b)
    jax.block_until_ready(out_bf16)
    assert out_bf16.dtype == jnp.bfloat16
    ref_bf16 = _reference(x_bf16, w_bf16, b)
    err = jnp.max(jnp.abs(out_bf16.astype(jnp.float32) - ref_bf16))
    assert jnp.allclose(out_bf16.astype(jnp.float32), ref_bf16,
                        atol=5e-2, rtol=5e-2), f"max abs err {err}"

    print("KERNEL_OK")
</pallas_src>

<mosaic_0001>
module attributes {stable_mosaic.version = 11 : i64} {
  func.func @_sentiment_kernel(%arg0: i32, %arg1: memref<128x32xf32, #tpu.memory_space<vmem>>, %arg2: memref<4x32xf32, #tpu.memory_space<vmem>>, %arg3: memref<4x1xf32, #tpu.memory_space<vmem>>, %arg4: memref<4x128xf32, #tpu.memory_space<vmem>>) attributes {dimension_semantics = [#tpu.dimension_semantics<parallel>], iteration_bounds = array<i64: 1>, scalar_prefetch = 0 : i64, scratch_operands = 0 : i64, tpu.core_type = #tpu.core_type<tc>, window_params = [{transform_indices = @transform_0, window_bounds = array<i64: 128, 32>}, {pipeline_mode = #tpu.pipeline_mode<synchronous>, transform_indices = @transform_1, window_bounds = array<i64: 4, 32>}, {pipeline_mode = #tpu.pipeline_mode<synchronous>, transform_indices = @transform_2, window_bounds = array<i64: 4, 1>}, {transform_indices = @transform_3, window_bounds = array<i64: 4, 128>}]} {
    %c0 = arith.constant 0 : index
    %c0_0 = arith.constant 0 : index
    %0 = vector.load %arg1[%c0, %c0_0] : memref<128x32xf32, #tpu.memory_space<vmem>>, vector<128x32xf32>
    %c0_1 = arith.constant 0 : index
    %c0_2 = arith.constant 0 : index
    %1 = vector.load %arg2[%c0_1, %c0_2] : memref<4x32xf32, #tpu.memory_space<vmem>>, vector<4x32xf32>
    %cst = arith.constant dense<0.000000e+00> : vector<4x128xf32>
    %2 = tpu.matmul %1, %0, %cst {dimension_numbers = #tpu.dot_dimension_numbers<[1], [1], [0], [0], [0, 0, 1, 0], [], []>} : vector<4x32xf32>, vector<128x32xf32>, vector<4x128xf32> -> vector<4x128xf32>
    %c0_3 = arith.constant 0 : index
    %c0_4 = arith.constant 0 : index
    %3 = vector.load %arg3[%c0_3, %c0_4] : memref<4x1xf32, #tpu.memory_space<vmem>>, vector<4x1xf32>
    %4 = vector.broadcast %3 : vector<4x1xf32> to vector<4x128xf32>
    %5 = arith.addf %2, %4 : vector<4x128xf32>
    %cst_5 = arith.constant dense<0xFF800000> : vector<128xf32>
    %6 = vector.multi_reduction <maximumf>, %5, %cst_5 [0] : vector<4x128xf32> to vector<128xf32>
    %7 = vector.shape_cast %6 : vector<128xf32> to vector<1x128xf32>
    %8 = vector.broadcast %7 : vector<1x128xf32> to vector<4x128xf32>
    %9 = arith.subf %5, %8 : vector<4x128xf32>
    %10 = math.exp %9 : vector<4x128xf32>
    %cst_6 = arith.constant dense<0.000000e+00> : vector<128xf32>
    %11 = vector.multi_reduction <add>, %10, %cst_6 [0] : vector<4x128xf32> to vector<128xf32>
    %12 = vector.shape_cast %11 : vector<128xf32> to vector<1x128xf32>
    %13 = math.log %12 : vector<1x128xf32>
    %14 = vector.broadcast %13 : vector<1x128xf32> to vector<4x128xf32>
    %15 = arith.subf %9, %14 : vector<4x128xf32>
    %c0_7 = arith.constant 0 : index
    %c0_8 = arith.constant 0 : index
    %16 = vector.load %arg4[%c0_7, %c0_8] : memref<4x128xf32, #tpu.memory_space<vmem>>, vector<4x128xf32>
    tpu.vector_store %arg4[%c0_7, %c0_8], %15 {strides = array<i32>} : memref<4x128xf32, #tpu.memory_space<vmem>>, vector<4x128xf32>,
    return
  }
  func.func @transform_0(%arg0: i32) -> (i32, i32) {
    %c0_i32 = arith.constant 0 : i32
    %c0_i32_0 = arith.constant 0 : i32
    return %arg0, %c0_i32 : i32, i32
  }
  func.func @transform_1(%arg0: i32) -> (i32, i32) {
    %c0_i32 = arith.constant 0 : i32
    %c0_i32_0 = arith.constant 0 : i32
    %c0_i32_1 = arith.constant 0 : i32
    return %c0_i32, %c0_i32_0 : i32, i32
  }
  func.func @transform_2(%arg0: i32) -> (i32, i32) {
    %c0_i32 = arith.constant 0 : i32
    %c0_i32_0 = arith.constant 0 : i32
    %c0_i32_1 = arith.constant 0 : i32
    return %c0_i32, %c0_i32_0 : i32, i32
  }
  func.func @transform_3(%arg0: i32) -> (i32, i32) {
    %c0_i32 = arith.constant 0 : i32
    %c0_i32_0 = arith.constant 0 : i32
    return %c0_i32, %arg0 : i32, i32
  }
}

</mosaic_0001>

<llo_original>
// kernel: _sentiment_forward.1
$region0: #{_sentiment_forward.1}
  #allocation0 [shape = 'u32[]', space=smem, size = 0x4, offset = 0x4, fixed_abs, tag = 'smem constant byte address 0x4 - core index']
  #allocation1 [shape = 'u32[72,128]{1,0:T(1,128)}', space=vmem, size = 0x9000, scoped, tag = 'internal scratch']
  %s0 = inlined_call_operand.hbm [shape: f32[8,32], index: 0, kind: input, shape index: {}]
  %s1 = inlined_call_operand.vmem [shape: f32[4,32], index: 1, kind: input, shape index: {}]
  %s2 = inlined_call_operand.vmem [shape: f32[4,1], index: 2, kind: input, shape index: {}]
  %s3 = inlined_call_operand.hbm [shape: f32[4,8], index: 3, kind: output, shape index: {}]
  %s4 = sld [smem:[#allocation0]]
  $region26: #{_sentiment_forward.1} parent=0
    _
  %s6 = ssub.s32 1, %s4
  %s7 = scalar_select 0, %s6, %s4
  $region1: #{_sentiment_forward.1} parent=0
    #allocation2 [shape = 'u8[65536]{0}', space=vmem, size = 0x10000, scoped, tag = 'input window, operand 0, single buffered']
    #allocation3 [shape = 's32[1]{0}', space=sflag, size = 0x4, scoped, tag = 'scoped memory for _sentiment_forward.1']
    #allocation4 [shape = 's32[1]{0}', space=sflag, size = 0x4, scoped, tag = 'scoped memory for _sentiment_forward.1']
    #allocation5 [shape = 'u8[2048]{0}', space=vmem, size = 0x800, scoped, tag = 'output window, operand 0, single buffered']
    %8 = vsyncpa [#allocation3], 0
    %9 = vsyncpa [#allocation4], 0
    // Predicated region
    $region2: #{_sentiment_forward.1} parent=1 // pred_check
      _
    $region3: #{_sentiment_forward.1} parent=1 // pred_check_branch
      %11 = sbr.rel (0) target = $region5
    $region4: #{_sentiment_forward.1} parent=1 // pred_region
      %13 = vsyncadd [#allocation3], 1920
      %s14 = sshll.u32 %s0, 4
      %s15 = int_to_ptr.hbm [resolvable:$true] %s14
      %s16 = sshll.u32 [#allocation2], 4
      %s17 = int_to_ptr.vmem [resolvable:$true] %s16
      %22 = dma.hbm_to_vmem [thread:$0]  %s15, 128, %s17, [#allocation3], 128, 128, 8
    $region5: #{_sentiment_forward.1} parent=1 // pred_fallthru
      _
    // Predicated region
    $region6: #{_sentiment_forward.1} parent=1 // pred_check
      _
    $region7: #{_sentiment_forward.1} parent=1 // pred_check_branch
      %24 = sbr.rel (0) target = $region9
    $region8: #{_sentiment_forward.1} parent=1 // pred_region
      _
    $region9: #{_sentiment_forward.1} parent=1 // pred_fallthru
      _
    // Predicated region
    $region10: #{_sentiment_forward.1} parent=1 // pred_check
      _
    $region11: #{_sentiment_forward.1} parent=1 // pred_check_branch
      %26 = sbr.rel (0) target = $region13
    $region12: #{_sentiment_forward.1} parent=1 // pred_region
      _
    $region13: #{_sentiment_forward.1} parent=1 // pred_fallthru
      _
    // Predicated region
    $region14: #{_sentiment_forward.1} parent=1 // pred_check
      _
    $region15: #{_sentiment_forward.1} parent=1 // pred_check_branch
      %28 = sbr.rel (0) target = $region17
    $region16: #{_sentiment_forward.1} parent=1 // pred_region
      %30 = dma.done [#allocation3], 2048
    $region17: #{_sentiment_forward.1} parent=1 // pred_fallthru
      _
    %v31 = vld [vmem:[#allocation2] sm:$0xff]
    %v32 = vld [vmem:[#allocation2 + $0x8] sm:$0xff]
    %v33 = vld [vmem:[#allocation2 + $0x10] sm:$0xff]
    %v34 = vld [vmem:[#allocation2 + $0x18] sm:$0xff]
    %v35 = vld [vmem:[#allocation2 + $0x20] sm:$0xff]
    %v36 = vld [vmem:[#allocation2 + $0x28] sm:$0xff]
    %v37 = vld [vmem:[#allocation2 + $0x30] sm:$0xff]
    %v38 = vld [vmem:[#allocation2 + $0x38] sm:$0xff]
    %v39 = vld [vmem:[#allocation2 + $0x40] sm:$0xff]
    %v40 = vld [vmem:[#allocation2 + $0x48] sm:$0xff]
    %v41 = vld [vmem:[#allocation2 + $0x50] sm:$0xff]
    %v42 = vld [vmem:[#allocation2 + $0x58] sm:$0xff]
    %v43 = vld [vmem:[#allocation2 + $0x60] sm:$0xff]
    %v44 = vld [vmem:[#allocation2 + $0x68] sm:$0xff]
    %v45 = vld [vmem:[#allocation2 + $0x70] sm:$0xff]
    %v46 = vld [vmem:[#allocation2 + $0x78] sm:$0xff]
    %v47 = vld [vmem:[%s1] sm:$0xf]
    %v48 = vld [vmem:[%s2] sm:$0xf]
    %50 = vset.pattern.permute.xlu0 0
    %51 = vperm.xlu0 %50, %v48
    %v52 = vpop.permute.xlu0 %51
    %vm54 = vcmask 261120
    %v56 = vsel %vm54, %v47, 0
    %v59 = vsel %vm54, %v31, 0
    %v62 = vsel %vm54, %v32, 0
    %v65 = vsel %vm54, %v33, 0
    %v68 = vsel %vm54, %v34, 0
    %v71 = vsel %vm54, %v35, 0
    %v74 = vsel %vm54, %v36, 0
    %v77 = vsel %vm54, %v37, 0
    %v80 = vsel %vm54, %v38, 0
    %v83 = vsel %vm54, %v39, 0
    %v86 = vsel %vm54, %v40, 0
    %v89 = vsel %vm54, %v41, 0
    %v92 = vsel %vm54, %v42, 0
    %v95 = vsel %vm54, %v43, 0
    %v98 = vsel %vm54, %v44, 0
    %v101 = vsel %vm54, %v45, 0
    %v104 = vsel %vm54, %v46, 0
    %106 = vmatpush.xpose.msra.mxu0 %v104
    %107 = vmatpush.xpose.msra.mxu0 %v101
    %108 = vmatpush.xpose.msra.mxu0 %v98
    %109 = vmatpush.xpose.msra.mxu0 %v95
    %110 = vmatpush.xpose.msra.mxu0 %v92
    %111 = vmatpush.xpose.msra.mxu0 %v89
    %112 = vmatpush.xpose.msra.mxu0 %v86
    %113 = vmatpush.xpose.msra.mxu0 %v83
    %114 = vmatpush.xpose.msra.mxu0 %v80
    %115 = vmatpush.xpose.msra.mxu0 %v77
    %116 = vmatpush.xpose.msra.mxu0 %v74
    %117 = vmatpush.xpose.msra.mxu0 %v71
    %118 = vmatpush.xpose.msra.mxu0 %v68
    %119 = vmatpush.xpose.msra.mxu0 %v65
    %120 = vmatpush.xpose.msra.mxu0 %v62
    %121 = vmatpush.xpose.msra.mxu0 %v59
    %122 = vmatmul.f32.gmra.mxu0 %v56
    %v123 = vpop.f32.mrf.mxu0
    %v124 = vadd.f32 %v52, %v123
    %125 = vdwg.mxu0
    %vm126 = vcmask 1043456
    %v127 = vsel %vm126, %v124, -inf
    %v128 = vrot.slane %v127, 4
    %v129 = vmax.f32 %v127, %v128
    %v130 = vrot.slane %v129, 2
    %v131 = vmax.f32 %v129, %v130
    %v132 = vrot.slane %v131, 1
    %v133 = vmax.f32 %v131, %v132
    %v134 = vsub.f32 %v124, %v133
    %v135 = vmul.f32 %v134, 1.442695
    %v136 = vpow.pop %v135
    %v137 = vsel %vm126, %v136, 0.0
    %v138 = vrot.slane %v137, 4
    %v139 = vadd.f32 %v137, %v138
    %v140 = vrot.slane %v139, 2
    %v141 = vadd.f32 %v139, %v140
    %v142 = vrot.slane %v141, 1
    %v143 = vadd.f32 %v141, %v142
    %v144 = vlog2.pop %v143
    %v145 = vmul.f32 %v144, 0.6931472
    %v146 = vsub.f32 %v134, %v145
    %147 = vst [vmem:[#allocation5] sm:$0xf] %v146
    // Predicated region
    $region18: #{_sentiment_forward.1} parent=1 // pred_check
      _
    $region19: #{_sentiment_forward.1} parent=1 // pred_check_branch
      %149 = sbr.rel (0) target = $region21
    $region20: #{_sentiment_forward.1} parent=1 // pred_region
      %151 = vsyncadd [#allocation4], 0
      %s153 = sshll.u32 [#allocation5], 4
      %s154 = int_to_ptr.vmem [resolvable:$true] %s153
      %s155 = sshll.u32 %s3, 4
      %s156 = int_to_ptr.hbm [resolvable:$true] %s155
      %158 = dma.vmem_to_hbm [thread:$0]  %s154, 64, %s156, [#allocation4]
    $region21: #{_sentiment_forward.1} parent=1 // pred_fallthru
      _
    // Predicated region
    $region22: #{_sentiment_forward.1} parent=1 // pred_check
      _
    $region23: #{_sentiment_forward.1} parent=1 // pred_check_branch
      %160 = sbr.rel (0) target = $region25
    $region24: #{_sentiment_forward.1} parent=1 // pred_region
      %162 = dma.done [#allocation4], 64
    $region25: #{_sentiment_forward.1} parent=1 // pred_fallthru
      _
    %163 = vsyncpa [#allocation3], 1
    %164 = vsyncpa [#allocation4], 1

</llo_original>
